<compile_context>
chip_gen: v5e
topology: v5e:2x2
jax: 0.10.0
libtpu: 0.0.40
codegen_flags: <defaults>
</compile_context>

<pallas_src>
import functools

import jax
import jax.numpy as jnp
from jax import lax
from jax.experimental import pallas as pl
from jax.experimental.pallas import tpu as pltpu


_COL_SEED_XOR = 0x27D4EB2F  # decorrelates the row / column hash streams


def _hash_bits24(idx, seed):
    """Deterministic 24-bit hash of an index vector (pure int32 arithmetic)."""
    h = idx * jnp.int32(214013) + seed
    h = h ^ ((h >> 15) & jnp.int32(0x1FFFF))
    h = h * jnp.int32(1103515245) + jnp.int32(12345)
    h = h ^ ((h >> 12) & jnp.int32(0xFFFFF))
    h = h * jnp.int32(214013) + jnp.int32(2531011)
    return (h >> 8) & jnp.int32(0x00FFFFFF)


def _pre_ln_residual_kernel(seed_ref, x_ref, g_ref, b_ref, w_ref, *rest,
                            p_drop, eps, tm, tn, multi_n):
    """One (TM, TN) output tile: out = x + dropout(LayerNorm(x) @ W[:, n])."""
    if multi_n:
        xres_ref, o_ref, normed_ref = rest
    else:
        o_ref, normed_ref = rest
        xres_ref = None

    n = pl.program_id(1)

    # --- LayerNorm once per row tile, cached in a bf16 VMEM scratch ---------
    @pl.when(n == 0)
    def _():
        xf = x_ref[...].astype(jnp.float32)
        mean = jnp.mean(xf, axis=-1, keepdims=True)
        xc = xf - mean
        var = jnp.mean(xc * xc, axis=-1, keepdims=True)   # unbiased=False
        normed = xc * lax.rsqrt(var + eps)
        normed = normed * g_ref[...] + b_ref[...]          # 1/(1-p) pre-folded
        normed_ref[...] = normed.astype(jnp.bfloat16)

    # --- sublayer: (TM, D) @ (D, TN) on the MXU, f32 accumulation -----------
    sub = jnp.dot(normed_ref[...], w_ref[...],
                  preferred_element_type=jnp.float32)      # (TM, TN) f32

    # --- dropout: factorized integer-hash keep mask (pure select) -----------
    if p_drop > 0.0:
        seed = seed_ref[0]
        rows = lax.broadcasted_iota(jnp.int32, (tm, 1), 0) + pl.program_id(0) * tm
        cols = lax.broadcasted_iota(jnp.int32, (1, tn), 1) + n * tn
        rbits = _hash_bits24(rows, seed)
        cbits = _hash_bits24(cols, seed ^ jnp.int32(_COL_SEED_XOR))
        keep = (rbits ^ cbits) >= jnp.int32(int(round(p_drop * (1 << 24))))
        sub = jnp.where(keep, sub, 0.0)

    # --- residual add in f32, store in the activation dtype -----------------
    x_res = (x_ref if xres_ref is None else xres_ref)[...].astype(jnp.float32)
    o_ref[...] = (x_res + sub).astype(o_ref.dtype)


def _choose_tm(m, d, itemsize):
    """Row-tile: MXU-row multiple (256), sized so the x tile is >= ~2 MiB."""
    if m <= 256:
        return m                                     # full extent: always legal
    target = max(256, (2 << 20) // max(1, d * itemsize))
    tm = min(m, 1024, target)
    return max(256, (tm // 256) * 256)


def _choose_tn(d):
    """Column tile for W: keep W resident for small D, stream tiles for big D."""
    if d % 128 != 0 or d <= 2048:
        return d
    for tn in (2048, 1024, 512, 256, 128):
        if d % tn == 0:
            return tn
    return d


def pre_layer_norm_residual(x, gamma, beta, w, *, seed=0, p_drop=0.1,
                            training=True, eps=1e-5, tm=None, tn=None):
    """Fused Pallas forward of PreLayerNormResidual with a linear sublayer.

    x     : [B, S, D] activations
    gamma : [D] LayerNorm scale        beta : [D] LayerNorm shift
    w     : [D, D] sublayer weight (pass bf16; cast once outside the hot path)
    """
    B, S, D = x.shape
    M = B * S
    assert w.shape == (D, D)
    if w.dtype != jnp.bfloat16:
        w = w.astype(jnp.bfloat16)    # fallback only; callers should pre-cast

    p = float(p_drop) if training else 0.0
    inv_keep = 1.0 / (1.0 - p) if p > 0.0 else 1.0
    # Sublayer is linear -> folding 1/(1-p) into gamma/beta is exact and makes
    # the in-kernel dropout a multiply-free select.
    g2d = (gamma.astype(jnp.float32) * inv_keep).reshape(1, D)
    b2d = (beta.astype(jnp.float32) * inv_keep).reshape(1, D)
    x2d = x.reshape(M, D)

    TM = _choose_tm(M, D, x.dtype.itemsize) if tm is None \
        else min(M, max(8, (int(tm) // 8) * 8))
    TN = _choose_tn(D) if tn is None else int(tn)
    assert D % TN == 0 and (TN == D or TN % 128 == 0)
    grid_m = pl.cdiv(M, TM)
    grid_n = D // TN
    multi_n = grid_n > 1

    in_specs = [
        pl.BlockSpec((TM, D), lambda i, n, s: (i, 0)),    # x row tile (LN input)
        pl.BlockSpec((1, D), lambda i, n, s: (0, 0)),     # gamma * inv_keep
        pl.BlockSpec((1, D), lambda i, n, s: (0, 0)),     # beta  * inv_keep
        pl.BlockSpec((D, TN), lambda i, n, s: (0, n)),    # W column tile (bf16)
    ]
    inputs = [x2d, g2d, b2d, w]
    if multi_n:
        # Residual chunk of x for the current column tile (avoids unsupported
        # dynamic lane slicing of the full-row x block).
        in_specs.append(pl.BlockSpec((TM, TN), lambda i, n, s: (i, n)))
        inputs.append(x2d)

    scratch_shapes = [pltpu.VMEM((TM, D), jnp.bfloat16)]  # cached LN(x)

    # VMEM budget from the actual footprint (streamed operands double-buffered).
    itemsize = x.dtype.itemsize
    footprint = (2 * (TM * D * itemsize + TM * TN * itemsize + D * TN * 2)
                 + (2 * TM * TN * itemsize if multi_n else 0)
                 + TM * D * 2 + 2 * (2 * D * 4))
    try:
        vmem_cap = int(pltpu.get_tpu_info().vmem_capacity_bytes)
    except Exception:
        vmem_cap = 128 * 1024 * 1024
    vmem_limit = int(min(max(2 * footprint, 32 * 1024 * 1024),
                         int(0.75 * vmem_cap)))

    seed_arr = jnp.asarray([seed], dtype=jnp.int32)
    kernel = functools.partial(_pre_ln_residual_kernel, p_drop=p, eps=float(eps),
                               tm=TM, tn=TN, multi_n=multi_n)

    cost = pl.CostEstimate(
        flops=2 * M * D * D,
        transcendentals=M,                                 # one rsqrt per row
        bytes_accessed=((2 if multi_n else 1) * M * D + M * D) * itemsize
        + grid_m * D * D * 2 + 4 * D * 4,
    )

    out2d = pl.pallas_call(
        kernel,
        out_shape=jax.ShapeDtypeStruct((M, D), x.dtype),
        grid_spec=pltpu.PrefetchScalarGridSpec(
            num_scalar_prefetch=1,                          # seed -> SMEM
            grid=(grid_m, grid_n),
            in_specs=in_specs,
            out_specs=pl.BlockSpec((TM, TN), lambda i, n, s: (i, n)),
            scratch_shapes=scratch_shapes,
        ),
        compiler_params=pltpu.CompilerParams(
            dimension_semantics=("parallel", "arbitrary"),  # rows megacore-split
            vmem_limit_bytes=vmem_limit,
        ),
        cost_estimate=cost,
    )(seed_arr, *inputs)

    return out2d.reshape(B, S, D)


def _reference(x, gamma, beta, w, seed, *, p_drop=0.1, eps=1e-5, training=True):
    """Pure-JAX reference replicating the kernel math (same bf16 matmul feed,
    same folded dropout scale, same factorized integer-hash mask)."""
    B, S, D = x.shape
    p = float(p_drop) if training else 0.0
    inv_keep = 1.0 / (1.0 - p) if p > 0.0 else 1.0
    xf = x.astype(jnp.float32)
    mean = xf.mean(-1, keepdims=True)
    xc = xf - mean
    var = (xc * xc).mean(-1, keepdims=True)
    normed = xc * lax.rsqrt(var + eps)
    normed = normed * (gamma.astype(jnp.float32) * inv_keep) \
        + (beta.astype(jnp.float32) * inv_keep)
    sub = jnp.einsum("bsd,de->bse", normed.astype(jnp.bfloat16),
                     w.astype(jnp.bfloat16), preferred_element_type=jnp.float32)
    if p > 0.0:
        rows = jnp.arange(B * S, dtype=jnp.int32).reshape(B, S, 1)
        cols = jnp.arange(D, dtype=jnp.int32).reshape(1, 1, D)
        rbits = _hash_bits24(rows, jnp.int32(seed))
        cbits = _hash_bits24(cols, jnp.int32(seed) ^ jnp.int32(_COL_SEED_XOR))
        keep = (rbits ^ cbits) >= jnp.int32(int(round(p_drop * (1 << 24))))
        sub = jnp.where(keep, sub, 0.0)
    return (xf + sub).astype(x.dtype)


if __name__ == "__main__":
    key = jax.random.PRNGKey(0)
    kx, kw, kg, kb, kx2, kw2 = jax.random.split(key, 6)

    # --- Config 1: D=128, two row tiles (tm=64), single W column tile -------
    B, S, D = 2, 64, 128
    x = jax.random.normal(kx, (B, S, D), dtype=jnp.float32)
    w = (jax.random.normal(kw, (D, D), dtype=jnp.float32) * 0.02).astype(jnp.bfloat16)
    gamma = 1.0 + 0.1 * jax.random.normal(kg, (D,), dtype=jnp.float32)
    beta = 0.05 * jax.random.normal(kb, (D,), dtype=jnp.float32)

    out_train = pre_layer_norm_residual(x, gamma, beta, w, seed=1234,
                                        p_drop=0.1, training=True, tm=64)
    out_train = jax.block_until_ready(out_train)
    ref_train = _reference(x, gamma, beta, w, 1234, p_drop=0.1, training=True)
    assert out_train.shape == (B, S, D)
    assert jnp.allclose(out_train, ref_train, atol=2e-3, rtol=2e-3), "train mismatch"

    out_eval = pre_layer_norm_residual(x, gamma, beta, w, seed=0,
                                       p_drop=0.1, training=False)
    out_eval = jax.block_until_ready(out_eval)
    ref_eval = _reference(x, gamma, beta, w, 0, p_drop=0.1, training=False)
    assert jnp.allclose(out_eval, ref_eval, atol=2e-3, rtol=2e-3), "eval mismatch"

    # --- Config 2: D=256 with TN=128 -> exercises the streamed-W column axis -
    B2, S2, D2 = 2, 32, 256
    x2 = jax.random.normal(kx2, (B2, S2, D2), dtype=jnp.float32)
    w2 = (jax.random.normal(kw2, (D2, D2), dtype=jnp.float32) * 0.02).astype(jnp.bfloat16)
    gamma2 = 1.0 + 0.05 * jnp.ones((D2,), jnp.float32)
    beta2 = 0.02 * jnp.ones((D2,), jnp.float32)
    out2 = pre_layer_norm_residual(x2, gamma2, beta2, w2, seed=7,
                                   p_drop=0.1, training=True, tn=128)
    out2 = jax.block_until_ready(out2)
    ref2 = _reference(x2, gamma2, beta2, w2, 7, p_drop=0.1, training=True)
    assert jnp.allclose(out2, ref2, atol=2e-3, rtol=2e-3), "column-tiled mismatch"

    print("KERNEL_OK")
</pallas_src>

<mosaic_0001>
module attributes {stable_mosaic.version = 11 : i64} {
  func.func @_pre_ln_residual_kernel(%arg0: i32, %arg1: i32, %arg2: memref<1xi32, #tpu.memory_space<smem>>, %arg3: memref<64x128xf32, #tpu.memory_space<vmem>>, %arg4: memref<1x128xf32, #tpu.memory_space<vmem>>, %arg5: memref<1x128xf32, #tpu.memory_space<vmem>>, %arg6: memref<128x128xbf16, #tpu.memory_space<vmem>>, %arg7: memref<64x128xf32, #tpu.memory_space<vmem>>, %arg8: memref<64x128xbf16, #tpu.memory_space<vmem>>) attributes {dimension_semantics = [#tpu.dimension_semantics<parallel>, #tpu.dimension_semantics<arbitrary>], iteration_bounds = array<i64: 2, 1>, scalar_prefetch = 1 : i64, scratch_operands = 1 : i64, tpu.core_type = #tpu.core_type<tc>, window_params = [{transform_indices = @transform_0, window_bounds = array<i64: 64, 128>}, {pipeline_mode = #tpu.pipeline_mode<synchronous>, transform_indices = @transform_1, window_bounds = array<i64: 1, 128>}, {pipeline_mode = #tpu.pipeline_mode<synchronous>, transform_indices = @transform_2, window_bounds = array<i64: 1, 128>}, {transform_indices = @transform_3, window_bounds = array<i64: 128, 128>}, {transform_indices = @transform_4, window_bounds = array<i64: 64, 128>}]} {
    %c0_i32 = arith.constant 0 : i32
    %0 = arith.cmpi eq, %arg1, %c0_i32 : i32
    %1 = arith.extui %0 : i1 to i32
    %c0_i32_0 = arith.constant 0 : i32
    %2 = arith.cmpi ne, %1, %c0_i32_0 : i32
    scf.if %2 {
      %c0_22 = arith.constant 0 : index
      %c0_23 = arith.constant 0 : index
      %78 = vector.load %arg3[%c0_22, %c0_23] : memref<64x128xf32, #tpu.memory_space<vmem>>, vector<64x128xf32>
      %cst_24 = arith.constant dense<0.000000e+00> : vector<64xf32>
      %79 = vector.multi_reduction <add>, %78, %cst_24 [1] : vector<64x128xf32> to vector<64xf32>
      %80 = vector.shape_cast %79 : vector<64xf32> to vector<64x1xf32>
      %cst_25 = arith.constant 1.280000e+02 : f32
      %81 = vector.broadcast %cst_25 : f32 to vector<64x1xf32>
      %82 = arith.divf %80, %81 : vector<64x1xf32>
      %83 = vector.broadcast %82 : vector<64x1xf32> to vector<64x128xf32>
      %84 = arith.subf %78, %83 : vector<64x128xf32>
      %85 = arith.mulf %84, %84 : vector<64x128xf32>
      %cst_26 = arith.constant dense<0.000000e+00> : vector<64xf32>
      %86 = vector.multi_reduction <add>, %85, %cst_26 [1] : vector<64x128xf32> to vector<64xf32>
      %87 = vector.shape_cast %86 : vector<64xf32> to vector<64x1xf32>
      %cst_27 = arith.constant 1.280000e+02 : f32
      %88 = vector.broadcast %cst_27 : f32 to vector<64x1xf32>
      %89 = arith.divf %87, %88 : vector<64x1xf32>
      %cst_28 = arith.constant 9.99999974E-6 : f32
      %90 = vector.broadcast %cst_28 : f32 to vector<64x1xf32>
      %91 = arith.addf %89, %90 : vector<64x1xf32>
      %92 = math.rsqrt %91 : vector<64x1xf32>
      %93 = vector.broadcast %92 : vector<64x1xf32> to vector<64x128xf32>
      %94 = arith.mulf %84, %93 : vector<64x128xf32>
      %c0_29 = arith.constant 0 : index
      %c0_30 = arith.constant 0 : index
      %95 = vector.load %arg4[%c0_29, %c0_30] : memref<1x128xf32, #tpu.memory_space<vmem>>, vector<1x128xf32>
      %96 = vector.broadcast %95 : vector<1x128xf32> to vector<64x128xf32>
      %97 = arith.mulf %94, %96 : vector<64x128xf32>
      %c0_31 = arith.constant 0 : index
      %c0_32 = arith.constant 0 : index
      %98 = vector.load %arg5[%c0_31, %c0_32] : memref<1x128xf32, #tpu.memory_space<vmem>>, vector<1x128xf32>
      %99 = vector.broadcast %98 : vector<1x128xf32> to vector<64x128xf32>
      %100 = arith.addf %97, %99 : vector<64x128xf32>
      %101 = arith.truncf %100 : vector<64x128xf32> to vector<64x128xbf16>
      %c0_33 = arith.constant 0 : index
      %c0_34 = arith.constant 0 : index
      %102 = vector.load %arg8[%c0_33, %c0_34] : memref<64x128xbf16, #tpu.memory_space<vmem>>, vector<64x128xbf16>
      tpu.vector_store %arg8[%c0_33, %c0_34], %101 {strides = array<i32>} : memref<64x128xbf16, #tpu.memory_space<vmem>>, vector<64x128xbf16>,
    } else {
    }
    %c0 = arith.constant 0 : index
    %c0_1 = arith.constant 0 : index
    %3 = vector.load %arg8[%c0, %c0_1] : memref<64x128xbf16, #tpu.memory_space<vmem>>, vector<64x128xbf16>
    %c0_2 = arith.constant 0 : index
    %c0_3 = arith.constant 0 : index
    %4 = vector.load %arg6[%c0_2, %c0_3] : memref<128x128xbf16, #tpu.memory_space<vmem>>, vector<128x128xbf16>
    %cst = arith.constant dense<0.000000e+00> : vector<64x128xf32>
    %5 = tpu.matmul %3, %4, %cst {dimension_numbers = #tpu.dot_dimension_numbers<[1], [0], [0], [1], [0, 0, 1, 1], [], []>} : vector<64x128xbf16>, vector<128x128xbf16>, vector<64x128xf32> -> vector<64x128xf32>
    %c0_4 = arith.constant 0 : index
    %6 = memref.load %arg2[%c0_4] : memref<1xi32, #tpu.memory_space<smem>>
    %7 = tpu.iota {dimensions = array<i32: 0>} : vector<64x1xi32>
    %c64_i32 = arith.constant 64 : i32
    %8 = arith.muli %arg0, %c64_i32 : i32
    %9 = vector.broadcast %8 : i32 to vector<64x1xi32>
    %10 = arith.addi %7, %9 : vector<64x1xi32>
    %11 = tpu.iota {dimensions = array<i32: 1>} : vector<1x128xi32>
    %c128_i32 = arith.constant 128 : i32
    %12 = arith.muli %arg1, %c128_i32 : i32
    %13 = vector.broadcast %12 : i32 to vector<1x128xi32>
    %14 = arith.addi %11, %13 : vector<1x128xi32>
    %c214013_i32 = arith.constant 214013 : i32
    %15 = vector.broadcast %c214013_i32 : i32 to vector<64x1xi32>
    %16 = arith.muli %10, %15 : vector<64x1xi32>
    %17 = vector.broadcast %6 : i32 to vector<64x1xi32>
    %18 = arith.addi %16, %17 : vector<64x1xi32>
    %c15_i32 = arith.constant 15 : i32
    %19 = vector.broadcast %c15_i32 : i32 to vector<64x1xi32>
    %20 = arith.shrsi %18, %19 : vector<64x1xi32>
    %c131071_i32 = arith.constant 131071 : i32
    %21 = vector.broadcast %c131071_i32 : i32 to vector<64x1xi32>
    %22 = arith.andi %20, %21 : vector<64x1xi32>
    %23 = arith.xori %18, %22 : vector<64x1xi32>
    %c1103515245_i32 = arith.constant 1103515245 : i32
    %24 = vector.broadcast %c1103515245_i32 : i32 to vector<64x1xi32>
    %25 = arith.muli %23, %24 : vector<64x1xi32>
    %c12345_i32 = arith.constant 12345 : i32
    %26 = vector.broadcast %c12345_i32 : i32 to vector<64x1xi32>
    %27 = arith.addi %25, %26 : vector<64x1xi32>
    %c12_i32 = arith.constant 12 : i32
    %28 = vector.broadcast %c12_i32 : i32 to vector<64x1xi32>
    %29 = arith.shrsi %27, %28 : vector<64x1xi32>
    %c1048575_i32 = arith.constant 1048575 : i32
    %30 = vector.broadcast %c1048575_i32 : i32 to vector<64x1xi32>
    %31 = arith.andi %29, %30 : vector<64x1xi32>
    %32 = arith.xori %27, %31 : vector<64x1xi32>
    %c214013_i32_5 = arith.constant 214013 : i32
    %33 = vector.broadcast %c214013_i32_5 : i32 to vector<64x1xi32>
    %34 = arith.muli %32, %33 : vector<64x1xi32>
    %c2531011_i32 = arith.constant 2531011 : i32
    %35 = vector.broadcast %c2531011_i32 : i32 to vector<64x1xi32>
    %36 = arith.addi %34, %35 : vector<64x1xi32>
    %c8_i32 = arith.constant 8 : i32
    %37 = vector.broadcast %c8_i32 : i32 to vector<64x1xi32>
    %38 = arith.shrsi %36, %37 : vector<64x1xi32>
    %c16777215_i32 = arith.constant 16777215 : i32
    %39 = vector.broadcast %c16777215_i32 : i32 to vector<64x1xi32>
    %40 = arith.andi %38, %39 : vector<64x1xi32>
    %c668265263_i32 = arith.constant 668265263 : i32
    %41 = arith.xori %6, %c668265263_i32 : i32
    %c214013_i32_6 = arith.constant 214013 : i32
    %42 = vector.broadcast %c214013_i32_6 : i32 to vector<1x128xi32>
    %43 = arith.muli %14, %42 : vector<1x128xi32>
    %44 = vector.broadcast %41 : i32 to vector<1x128xi32>
    %45 = arith.addi %43, %44 : vector<1x128xi32>
    %c15_i32_7 = arith.constant 15 : i32
    %46 = vector.broadcast %c15_i32_7 : i32 to vector<1x128xi32>
    %47 = arith.shrsi %45, %46 : vector<1x128xi32>
    %c131071_i32_8 = arith.constant 131071 : i32
    %48 = vector.broadcast %c131071_i32_8 : i32 to vector<1x128xi32>
    %49 = arith.andi %47, %48 : vector<1x128xi32>
    %50 = arith.xori %45, %49 : vector<1x128xi32>
    %c1103515245_i32_9 = arith.constant 1103515245 : i32
    %51 = vector.broadcast %c1103515245_i32_9 : i32 to vector<1x128xi32>
    %52 = arith.muli %50, %51 : vector<1x128xi32>
    %c12345_i32_10 = arith.constant 12345 : i32
    %53 = vector.broadcast %c12345_i32_10 : i32 to vector<1x128xi32>
    %54 = arith.addi %52, %53 : vector<1x128xi32>
    %c12_i32_11 = arith.constant 12 : i32
    %55 = vector.broadcast %c12_i32_11 : i32 to vector<1x128xi32>
    %56 = arith.shrsi %54, %55 : vector<1x128xi32>
    %c1048575_i32_12 = arith.constant 1048575 : i32
    %57 = vector.broadcast %c1048575_i32_12 : i32 to vector<1x128xi32>
    %58 = arith.andi %56, %57 : vector<1x128xi32>
    %59 = arith.xori %54, %58 : vector<1x128xi32>
    %c214013_i32_13 = arith.constant 214013 : i32
    %60 = vector.broadcast %c214013_i32_13 : i32 to vector<1x128xi32>
    %61 = arith.muli %59, %60 : vector<1x128xi32>
    %c2531011_i32_14 = arith.constant 2531011 : i32
    %62 = vector.broadcast %c2531011_i32_14 : i32 to vector<1x128xi32>
    %63 = arith.addi %61, %62 : vector<1x128xi32>
    %c8_i32_15 = arith.constant 8 : i32
    %64 = vector.broadcast %c8_i32_15 : i32 to vector<1x128xi32>
    %65 = arith.shrsi %63, %64 : vector<1x128xi32>
    %c16777215_i32_16 = arith.constant 16777215 : i32
    %66 = vector.broadcast %c16777215_i32_16 : i32 to vector<1x128xi32>
    %67 = arith.andi %65, %66 : vector<1x128xi32>
    %68 = vector.broadcast %40 : vector<64x1xi32> to vector<64x128xi32>
    %69 = vector.broadcast %67 : vector<1x128xi32> to vector<64x128xi32>
    %70 = arith.xori %68, %69 : vector<64x128xi32>
    %c1677722_i32 = arith.constant 1677722 : i32
    %71 = vector.broadcast %c1677722_i32 : i32 to vector<64x128xi32>
    %72 = arith.cmpi sge, %70, %71 : vector<64x128xi32>
    %cst_17 = arith.constant 0.000000e+00 : f32
    %73 = vector.broadcast %cst_17 : f32 to vector<64x128xf32>
    %74 = arith.select %72, %5, %73 : vector<64x128xi1>, vector<64x128xf32>
    %c0_18 = arith.constant 0 : index
    %c0_19 = arith.constant 0 : index
    %75 = vector.load %arg3[%c0_18, %c0_19] : memref<64x128xf32, #tpu.memory_space<vmem>>, vector<64x128xf32>
    %76 = arith.addf %75, %74 : vector<64x128xf32>
    %c0_20 = arith.constant 0 : index
    %c0_21 = arith.constant 0 : index
    %77 = vector.load %arg7[%c0_20, %c0_21] : memref<64x128xf32, #tpu.memory_space<vmem>>, vector<64x128xf32>
    tpu.vector_store %arg7[%c0_20, %c0_21], %76 {strides = array<i32>} : memref<64x128xf32, #tpu.memory_space<vmem>>, vector<64x128xf32>,
    return
  }
  func.func @transform_0(%arg0: i32, %arg1: i32, %arg2: memref<1xi32, #tpu.memory_space<smem>>) -> (i32, i32) {
    %c0_i32 = arith.constant 0 : i32
    %c0_i32_0 = arith.constant 0 : i32
    return %arg0, %c0_i32 : i32, i32
  }
  func.func @transform_1(%arg0: i32, %arg1: i32, %arg2: memref<1xi32, #tpu.memory_space<smem>>) -> (i32, i32) {
    %c0_i32 = arith.constant 0 : i32
    %c0_i32_0 = arith.constant 0 : i32
    %c0_i32_1 = arith.constant 0 : i32
    return %c0_i32, %c0_i32_0 : i32, i32
  }
  func.func @transform_2(%arg0: i32, %arg1: i32, %arg2: memref<1xi32, #tpu.memory_space<smem>>) -> (i32, i32) {
    %c0_i32 = arith.constant 0 : i32
    %c0_i32_0 = arith.constant 0 : i32
    %c0_i32_1 = arith.constant 0 : i32
    return %c0_i32, %c0_i32_0 : i32, i32
  }
  func.func @transform_3(%arg0: i32, %arg1: i32, %arg2: memref<1xi32, #tpu.memory_space<smem>>) -> (i32, i32) {
    %c0_i32 = arith.constant 0 : i32
    %c0_i32_0 = arith.constant 0 : i32
    return %c0_i32, %arg1 : i32, i32
  }
  func.func @transform_4(%arg0: i32, %arg1: i32, %arg2: memref<1xi32, #tpu.memory_space<smem>>) -> (i32, i32) {
    %c0_i32 = arith.constant 0 : i32
    return %arg0, %arg1 : i32, i32
  }
}

</mosaic_0001>

<llo_original>
// kernel: tpu_custom_call.1
$region0: #{tpu_custom_call.1}
  #allocation0 [shape = 'u32[]', space=smem, size = 0x4, offset = 0x4, fixed_abs, tag = 'smem constant byte address 0x4 - core index']
  #allocation1 [shape = 'u32[72,128]{1,0:T(1,128)}', space=vmem, size = 0x9000, scoped, tag = 'internal scratch']
  #allocation2 [shape = 'bf16[64,128]{1,0:T(8,128)(2,1)}', space=vmem, size = 0x4000, scoped, tag = 'scratch operand']
  #allocation3 [shape = 's32[1]{0}', space=sflag, size = 0x4, scoped, tag = 'scoped memory for tpu_custom_call.1']
  #allocation4 [shape = 's32[1]{0:T(128)S(6)}', space=smem, size = 0x200, scoped, tag = 'prefetched SMEM operand 0']
  %s0 = inlined_call_operand.<no memory space> [shape: s32[1], index: 0, kind: input, shape index: {}]
  %s1 = inlined_call_operand.hbm [shape: f32[128,128], index: 1, kind: input, shape index: {}]
  %s2 = inlined_call_operand.vmem [shape: f32[1,128], index: 2, kind: input, shape index: {}]
  %s3 = inlined_call_operand.vmem [shape: f32[1,128], index: 3, kind: input, shape index: {}]
  %s4 = inlined_call_operand.hbm [shape: bf16[128,128], index: 4, kind: input, shape index: {}]
  %s5 = inlined_call_operand.hbm [shape: f32[128,128], index: 5, kind: output, shape index: {}]
  %s6 = sld [smem:[#allocation0]]
  $region61: #{tpu_custom_call.1} parent=0
    _
  %s8 = ssub.s32 1, %s6
  %s9 = scalar_select 0, %s8, %s6
  %10 = sst [smem:[#allocation4]] %s0
  $region1: #{tpu_custom_call.1} parent=0
    #allocation5 [shape = 'u8[65536]{0}', space=vmem, size = 0x10000, scoped, tag = 'input window, operand 1']
    #allocation6 [shape = 's32[2]{0}', space=sflag, size = 0x8, scoped, tag = 'scoped memory for tpu_custom_call.1']
    #allocation7 [shape = 's32[2]{0}', space=sflag, size = 0x8, scoped, tag = 'scoped memory for tpu_custom_call.1']
    #allocation8 [shape = 'u8[32768]{0}', space=vmem, size = 0x8000, scoped, tag = 'input window, operand 4, single buffered']
    #allocation9 [shape = 's32[1]{0}', space=sflag, size = 0x4, scoped, tag = 'scoped memory for tpu_custom_call.1']
    #allocation10 [shape = 'u8[65536]{0}', space=vmem, size = 0x10000, scoped, tag = 'output window, operand 0']
    %11 = vsyncpa [#allocation6], 0
    %s12 = scalar_lea.sflag [#allocation6], 1
    %13 = vsyncpa %s12, 0
    %14 = vsyncpa [#allocation9], 0
    %15 = vsyncpa [#allocation7], 0
    %s16 = scalar_lea.sflag [#allocation7], 1
    %17 = vsyncpa %s16, 0
    loop: start=0, step=1, limit=4
    $region2: #{tpu_custom_call.1} parent=1 // loop_pre_header
      _
    $region3: #{tpu_custom_call.1} parent=1 // loop_header
      %s19 = sphi 0, %s23
      %p20 = scmp.ge.s32.totalorder %s19, 4
      %s26 = sphi 0, %s38
      %s27 = sphi 0, %s34
      %s28 = sphi 0, %s26
      %s29 = sphi 0, %s27
      %s30 = sphi 0, %s28
      %s31 = sphi 0, %s29
      %s41 = sphi 0, %s43
      %s44 = sphi 0, %s41
      %s45 = sphi 0, %s44
      %s61 = sphi 0, %s45
      %s65 = sphi 0, %s65
      %s67 = sphi 0, %s65
      %s68 = sphi 0, %s67
      %s82 = sphi 0, %s68
      %s86 = sphi 0, %s86
      %s88 = sphi 0, %s86
      %s89 = sphi 0, %s88
      %s103 = sphi 0, %s89
      %s109 = sphi 0, %s111
      %s112 = sphi 0, %s109
      %s113 = sphi 0, %s112
      %s129 = sphi 0, %s113
      %s137 = sphi 0, %s139
      %s140 = sphi 0, %s137
      %s141 = sphi 0, %s140
      %s157 = sphi 0, %s141
    $region4: #{tpu_custom_call.1} parent=1 // loop_header_branch
      %22 = sbr.rel (%p20) target = $region8
    $region5: #{tpu_custom_call.1} parent=1 // loop_body
      %s24 = ssub.s32 %s19, 1
      %s25 = ssub.s32 %s19, 2
      %s32 = sadd.s32 1, %s27
      %p33 = scmp.ge.s32.totalorder %s32, 1
      %s34 = scalar_select %p33, 0, %s32
      %s35 = sadd.s32 1, %s26
      %s36 = scalar_select %p33, %s35, %s26
      %p37 = scmp.ge.s32.totalorder %s36, 2
      %s38 = scalar_select %p37, 0, %s36
      %s39 = ssub.s32 %s26, %s38
      %p40 = scmp.eq.s32.totalorder %s39, 0
      %s42 = sadd.s32 %s41, 1
      %s43 = scalar_select %p40, %s41, %s42
      %p46 = pneg %p40
      %p47 = scmp.eq.s32.totalorder %s19, 1
      %p48 = por %p46, %p47
      %p49 = scmp.ne.s32.totalorder %s41, %s44
      %p50 = scmp.eq.s32.totalorder %s19, 0
      %p51 = por %p49, %p50
      %p52 = scmp.ne.s32.totalorder %s41, %s44
      %p53 = scmp.eq.s32.totalorder %s24, 1
      %p54 = por %p52, %p53
      %p55 = scmp.ne.s32.totalorder %s44, %s45
      %p56 = scmp.eq.s32.totalorder %s24, 0
      %p57 = por %p55, %p56
      %p58 = scmp.ne.s32.totalorder %s44, %s45
      %p59 = scmp.eq.s32.totalorder %s25, 1
      %p60 = por %p58, %p59
      %p62 = scmp.ne.s32.totalorder %s45, %s61
      %p63 = scmp.eq.s32.totalorder %s25, 0
      %p64 = por %p62, %p63
      %s66 = sadd.s32 %s65, 1
      %p69 = scmp.eq.s32.totalorder %s19, 1
      %p70 = scmp.ne.s32.totalorder %s65, %s67
      %p71 = scmp.eq.s32.totalorder %s19, 0
      %p72 = por %p70, %p71
      %p73 = scmp.ne.s32.totalorder %s65, %s67
      %p74 = scmp.eq.s32.totalorder %s24, 1
      %p75 = por %p73, %p74
      %p76 = scmp.ne.s32.totalorder %s67, %s68
      %p77 = scmp.eq.s32.totalorder %s24, 0
      %p78 = por %p76, %p77
      %p79 = scmp.ne.s32.totalorder %s67, %s68
      %p80 = scmp.eq.s32.totalorder %s25, 1
      %p81 = por %p79, %p80
      %p83 = scmp.ne.s32.totalorder %s68, %s82
      %p84 = scmp.eq.s32.totalorder %s25, 0
      %p85 = por %p83, %p84
      %s87 = sadd.s32 %s86, 1
      %p90 = scmp.eq.s32.totalorder %s19, 1
      %p91 = scmp.ne.s32.totalorder %s86, %s88
      %p92 = scmp.eq.s32.totalorder %s19, 0
      %p93 = por %p91, %p92
      %p94 = scmp.ne.s32.totalorder %s86, %s88
      %p95 = scmp.eq.s32.totalorder %s24, 1
      %p96 = por %p94, %p95
      %p97 = scmp.ne.s32.totalorder %s88, %s89
      %p98 = scmp.eq.s32.totalorder %s24, 0
      %p99 = por %p97, %p98
      %p100 = scmp.ne.s32.totalorder %s88, %s89
      %p101 = scmp.eq.s32.totalorder %s25, 1
      %p102 = por %p100, %p101
      %p104 = scmp.ne.s32.totalorder %s89, %s103
      %p105 = scmp.eq.s32.totalorder %s25, 0
      %p106 = por %p104, %p105
      %s107 = ssub.s32 %s27, %s34
      %p108 = scmp.eq.s32.totalorder %s107, 0
      %s110 = sadd.s32 %s109, 1
      %s111 = scalar_select %p108, %s109, %s110
      %p114 = pneg %p108
      %p115 = scmp.eq.s32.totalorder %s19, 1
      %p116 = por %p114, %p115
      %p117 = scmp.ne.s32.totalorder %s109, %s112
      %p118 = scmp.eq.s32.totalorder %s19, 0
      %p119 = por %p117, %p118
      %p120 = scmp.ne.s32.totalorder %s109, %s112
      %p121 = scmp.eq.s32.totalorder %s24, 1
      %p122 = por %p120, %p121
      %p123 = scmp.ne.s32.totalorder %s112, %s113
      %p124 = scmp.eq.s32.totalorder %s24, 0
      %p125 = por %p123, %p124
      %p126 = scmp.ne.s32.totalorder %s112, %s113
      %p127 = scmp.eq.s32.totalorder %s25, 1
      %p128 = por %p126, %p127
      %p130 = scmp.ne.s32.totalorder %s113, %s129
      %p131 = scmp.eq.s32.totalorder %s25, 0
      %p132 = por %p130, %p131
      %s133 = ssub.s32 %s26, %s38
      %s134 = ssub.s32 %s27, %s34
      %s135 = sor.u32 %s133, %s134
      %p136 = scmp.eq.s32.totalorder %s135, 0
      %s138 = sadd.s32 %s137, 1
      %s139 = scalar_select %p136, %s137, %s138
      %p142 = pneg %p136
      %p143 = scmp.eq.s32.totalorder %s19, 1
      %p144 = por %p142, %p143
      %p145 = scmp.ne.s32.totalorder %s137, %s140
      %p146 = scmp.eq.s32.totalorder %s19, 0
      %p147 = por %p145, %p146
      %p148 = scmp.ne.s32.totalorder %s137, %s140
      %p149 = scmp.eq.s32.totalorder %s24, 1
      %p150 = por %p148, %p149
      %p151 = scmp.ne.s32.totalorder %s140, %s141
      %p152 = scmp.eq.s32.totalorder %s24, 0
      %p153 = por %p151, %p152
      %p154 = scmp.ne.s32.totalorder %s140, %s141
      %p155 = scmp.eq.s32.totalorder %s25, 1
      %p156 = por %p154, %p155
      %p158 = scmp.ne.s32.totalorder %s141, %s157
      %p159 = scmp.eq.s32.totalorder %s25, 0
      %p160 = por %p158, %p159
      %p161 = scmp.le.s32.totalorder 1, %s19
      %p162 = scmp.lt.s32.totalorder %s19, 3
      %p163 = pnand %p161, %p162
      %p164 = pneg %p163
      // Predicated region
      $region9: #{tpu_custom_call.1} parent=5 // pred_check
        _
      $region10: #{tpu_custom_call.1} parent=5 // pred_check_branch
        %166 = sbr.rel (%p163) target = $region12
      $region11: #{tpu_custom_call.1} parent=5 // pred_region
        %s167 = ssub.s32 %s19, 1
        // Predicated region
        $region13: #{tpu_custom_call.1} parent=11 // pred_check
          %p168 = pneg %p78
        $region14: #{tpu_custom_call.1} parent=11 // pred_check_branch
          %170 = sbr.rel (%p168) target = $region16
        $region15: #{tpu_custom_call.1} parent=11 // pred_region
          _
        $region16: #{tpu_custom_call.1} parent=11 // pred_fallthru
          _
        // Predicated region
        $region17: #{tpu_custom_call.1} parent=11 // pred_check
          %p171 = pneg %p99
        $region18: #{tpu_custom_call.1} parent=11 // pred_check_branch
          %173 = sbr.rel (%p171) target = $region20
        $region19: #{tpu_custom_call.1} parent=11 // pred_region
          _
        $region20: #{tpu_custom_call.1} parent=11 // pred_fallthru
          _
        // Predicated region
        $region21: #{tpu_custom_call.1} parent=11 // pred_check
          %p174 = pneg %p125
        $region22: #{tpu_custom_call.1} parent=11 // pred_check_branch
          %176 = sbr.rel (%p174) target = $region24
        $region23: #{tpu_custom_call.1} parent=11 // pred_region
          %178 = vsyncadd [#allocation9], 0
          %s179 = smul.addr %s29, 4
          %s180 = scalar_lea.hbm %s4, %s179
          %s181 = sshll.u32 %s180, 4
          %s182 = int_to_ptr.hbm [resolvable:$true] %s181
          %s183 = sshll.u32 [#allocation8], 4
          %s184 = int_to_ptr.vmem [resolvable:$true] %s183
          %189 = dma.hbm_to_vmem [thread:$0]  %s182, 1024, %s184, [#allocation9], 64, 64, 4
        $region24: #{tpu_custom_call.1} parent=11 // pred_fallthru
          _
      $region12: #{tpu_custom_call.1} parent=5 // pred_fallthru
        _
      %p190 = scmp.lt.s32.totalorder %s19, 2
      // Predicated region
      $region25: #{tpu_custom_call.1} parent=5 // pred_check
        %p191 = pneg %p190
      $region26: #{tpu_custom_call.1} parent=5 // pred_check_branch
        %193 = sbr.rel (%p191) target = $region28
      $region27: #{tpu_custom_call.1} parent=5 // pred_region
        // Predicated region
        $region29: #{tpu_custom_call.1} parent=27 // pred_check
          %p194 = pneg %p51
        $region30: #{tpu_custom_call.1} parent=27 // pred_check_branch
          %196 = sbr.rel (%p194) target = $region32
        $region31: #{tpu_custom_call.1} parent=27 // pred_region
          %s197 = sand.u32 %s41, 1
          %s198 = scalar_lea.sflag [#allocation6], %s197
          %s199 = sand.u32 %s41, 1
          %s200 = smul.addr %s199, 64
          %s201 = scalar_lea.vmem [#allocation5], %s200
          %s202 = smul.u32 8, %s26
          %204 = vsyncadd %s198, 0
          %s205 = smul.addr %s202, 8
          %s206 = scalar_lea.hbm %s1, %s205
          %s207 = sshll.u32 %s206, 4
          %s208 = int_to_ptr.hbm [resolvable:$true] %s207
          %s209 = sshll.u32 %s201, 4
          %s210 = int_to_ptr.vmem [resolvable:$true] %s209
          %215 = dma.hbm_to_vmem [thread:$0]  %s208, 1024, %s210, %s198, 128, 128, 8
        $region32: #{tpu_custom_call.1} parent=27 // pred_fallthru
          _
      $region28: #{tpu_custom_call.1} parent=5 // pred_fallthru
        _
      %p216 = scmp.le.s32.totalorder 1, %s19
      %p217 = scmp.lt.s32.totalorder %s19, 3
      %p218 = pnand %p216, %p217
      %p219 = pneg %p218
      // Predicated region
      $region33: #{tpu_custom_call.1} parent=5 // pred_check
        _
      $region34: #{tpu_custom_call.1} parent=5 // pred_check_branch
        %221 = sbr.rel (%p218) target = $region36
      $region35: #{tpu_custom_call.1} parent=5 // pred_region
        %s222 = ssub.s32 %s19, 1
        %s223 = sand.u32 %s44, 1
        %s224 = scalar_lea.sflag [#allocation6], %s223
        %s225 = sand.u32 %s44, 1
        %s226 = smul.addr %s225, 64
        %s227 = scalar_lea.vmem [#allocation5], %s226
        // Predicated region
        $region37: #{tpu_custom_call.1} parent=35 // pred_check
          %p228 = pneg %p57
        $region38: #{tpu_custom_call.1} parent=35 // pred_check_branch
          %230 = sbr.rel (%p228) target = $region40
        $region39: #{tpu_custom_call.1} parent=35 // pred_region
          %232 = dma.done %s224, 1024
        $region40: #{tpu_custom_call.1} parent=35 // pred_fallthru
          _
        // Predicated region
        $region41: #{tpu_custom_call.1} parent=35 // pred_check
          %p233 = pneg %p125
        $region42: #{tpu_custom_call.1} parent=35 // pred_check_branch
          %235 = sbr.rel (%p233) target = $region44
        $region43: #{tpu_custom_call.1} parent=35 // pred_region
          %237 = dma.done [#allocation9], 1024
        $region44: #{tpu_custom_call.1} parent=35 // pred_fallthru
          _
        %s238 = sand.u32 %s44, 1
        %s239 = scalar_lea.sflag [#allocation6], %s238
        %s240 = sand.u32 %s44, 1
        %s241 = smul.addr %s240, 64
        %s242 = scalar_lea.vmem [#allocation5], %s241
        %p243 = pneg %p57
        %p244 = pneg %p54
        %p245 = pneg %p78
        %p246 = pneg %p75
        %p247 = pneg %p99
        %p248 = pneg %p96
        %p249 = pneg %p125
        %p250 = pneg %p122
        %p251 = pneg %p153
        %p252 = pneg %p150
        %s253 = sand.u32 %s140, 1
        %s254 = scalar_lea.sflag [#allocation7], %s253
        %s255 = sand.u32 %s140, 1
        %s256 = smul.addr %s255, 64
        %s257 = scalar_lea.vmem [#allocation10], %s256
        %s258 = smul.u32 8, %s28
        %s259 = smul.u32 8, %s28
        %p260 = scmp.eq.s32.totalorder %s29, 0
        // Predicated region
        $region45: #{tpu_custom_call.1} parent=35 // pred_check
          %p261 = pneg %p260
        $region46: #{tpu_custom_call.1} parent=35 // pred_check_branch
          %263 = sbr.rel (%p261) target = $region48
        $region47: #{tpu_custom_call.1} parent=35 // pred_region
          %v264 = vld [vmem:[%s227] sm:$0xff]
          %v265 = vld [vmem:[%s227 + $0x8] sm:$0xff]
          %v266 = vld [vmem:[%s227 + $0x10] sm:$0xff]
          %v267 = vld [vmem:[%s227 + $0x18] sm:$0xff]
          %v268 = vld [vmem:[%s227 + $0x20] sm:$0xff]
          %v269 = vld [vmem:[%s227 + $0x28] sm:$0xff]
          %v270 = vld [vmem:[%s227 + $0x30] sm:$0xff]
          %v271 = vld [vmem:[%s227 + $0x38] sm:$0xff]
          %272 = vadd.xlane.f32.xlu0 %v264
          %v273 = vpop.xlane.xlu0 %272
          %274 = vadd.xlane.f32.xlu0 %v265
          %v275 = vpop.xlane.xlu0 %274
          %276 = vadd.xlane.f32.xlu0 %v266
          %v277 = vpop.xlane.xlu0 %276
          %278 = vadd.xlane.f32.xlu0 %v267
          %v279 = vpop.xlane.xlu0 %278
          %280 = vadd.xlane.f32.xlu0 %v268
          %v281 = vpop.xlane.xlu0 %280
          %282 = vadd.xlane.f32.xlu0 %v269
          %v283 = vpop.xlane.xlu0 %282
          %284 = vadd.xlane.f32.xlu0 %v270
          %v285 = vpop.xlane.xlu0 %284
          %286 = vadd.xlane.f32.xlu0 %v271
          %v287 = vpop.xlane.xlu0 %286
          %v288 = vrcp.pop 128.0
          %v289 = vmul.f32 128.0, %v288
          %v290 = vsub.f32 1.0, %v289
          %v291 = vmul.f32 %v288, %v290
          %v292 = vadd.f32 %v288, %v291
          %vm293 = vweird.f32 %v288
          %v294 = vsel %vm293, %v288, %v292
          %v295 = vmul.f32 %v273, %v294
          %v296 = vmul.f32 %v275, %v294
          %v297 = vmul.f32 %v277, %v294
          %v298 = vmul.f32 %v279, %v294
          %v299 = vmul.f32 %v281, %v294
          %v300 = vmul.f32 %v283, %v294
          %v301 = vmul.f32 %v285, %v294
          %v302 = vmul.f32 %v287, %v294
          %v303 = vsub.f32 %v264, %v295
          %v304 = vsub.f32 %v265, %v296
          %v305 = vsub.f32 %v266, %v297
          %v306 = vsub.f32 %v267, %v298
          %v307 = vsub.f32 %v268, %v299
          %v308 = vsub.f32 %v269, %v300
          %v309 = vsub.f32 %v270, %v301
          %v310 = vsub.f32 %v271, %v302
          %v311 = vmul.f32 %v303, %v303
          %v312 = vmul.f32 %v304, %v304
          %v313 = vmul.f32 %v305, %v305
          %v314 = vmul.f32 %v306, %v306
          %v315 = vmul.f32 %v307, %v307
          %v316 = vmul.f32 %v308, %v308
          %v317 = vmul.f32 %v309, %v309
          %v318 = vmul.f32 %v310, %v310
          %319 = vadd.xlane.f32.xlu0 %v311
          %v320 = vpop.xlane.xlu0 %319
          %321 = vadd.xlane.f32.xlu0 %v312
          %v322 = vpop.xlane.xlu0 %321
          %323 = vadd.xlane.f32.xlu0 %v313
          %v324 = vpop.xlane.xlu0 %323
          %325 = vadd.xlane.f32.xlu0 %v314
          %v326 = vpop.xlane.xlu0 %325
          %327 = vadd.xlane.f32.xlu0 %v315
          %v328 = vpop.xlane.xlu0 %327
          %329 = vadd.xlane.f32.xlu0 %v316
          %v330 = vpop.xlane.xlu0 %329
          %331 = vadd.xlane.f32.xlu0 %v317
          %v332 = vpop.xlane.xlu0 %331
          %333 = vadd.xlane.f32.xlu0 %v318
          %v334 = vpop.xlane.xlu0 %333
          %v335 = vmul.f32 %v320, %v294
          %v336 = vmul.f32 %v322, %v294
          %v337 = vmul.f32 %v324, %v294
          %v338 = vmul.f32 %v326, %v294
          %v339 = vmul.f32 %v328, %v294
          %v340 = vmul.f32 %v330, %v294
          %v341 = vmul.f32 %v332, %v294
          %v342 = vmul.f32 %v334, %v294
          %v343 = vadd.f32 %v335, 1e-05
          %v344 = vadd.f32 %v336, 1e-05
          %v345 = vadd.f32 %v337, 1e-05
          %v346 = vadd.f32 %v338, 1e-05
          %v347 = vadd.f32 %v339, 1e-05
          %v348 = vadd.f32 %v340, 1e-05
          %v349 = vadd.f32 %v341, 1e-05
          %v350 = vadd.f32 %v342, 1e-05
          %v351 = vrsqrt.pop %v343
          %v352 = vmul.f32 %v351, %v343
          %v353 = vmul.f32 %v352, %v351
          %v354 = vmul.f32 0.5, %v353
          %v355 = vsub.f32 1.5, %v354
          %v356 = vmul.f32 %v351, %v355
          %vm357 = vweird.f32 %v343
          %vm358 = vweird.f32 %v351
          %vm359 = vmor %vm357, %vm358
          %v360 = vsel %vm359, %v351, %v356
          %v361 = vrsqrt.pop %v344
          %v362 = vmul.f32 %v361, %v344
          %v363 = vmul.f32 %v362, %v361
          %v364 = vmul.f32 0.5, %v363
          %v365 = vsub.f32 1.5, %v364
          %v366 = vmul.f32 %v361, %v365
          %vm367 = vweird.f32 %v344
          %vm368 = vweird.f32 %v361
          %vm369 = vmor %vm367, %vm368
          %v370 = vsel %vm369, %v361, %v366
          %v371 = vrsqrt.pop %v345
          %v372 = vmul.f32 %v371, %v345
          %v373 = vmul.f32 %v372, %v371
          %v374 = vmul.f32 0.5, %v373
          %v375 = vsub.f32 1.5, %v374
          %v376 = vmul.f32 %v371, %v375
          %vm377 = vweird.f32 %v345
          %vm378 = vweird.f32 %v371
          %vm379 = vmor %vm377, %vm378
          %v380 = vsel %vm379, %v371, %v376
          %v381 = vrsqrt.pop %v346
          %v382 = vmul.f32 %v381, %v346
          %v383 = vmul.f32 %v382, %v381
          %v384 = vmul.f32 0.5, %v383
          %v385 = vsub.f32 1.5, %v384
          %v386 = vmul.f32 %v381, %v385
          %vm387 = vweird.f32 %v346
          %vm388 = vweird.f32 %v381
          %vm389 = vmor %vm387, %vm388
          %v390 = vsel %vm389, %v381, %v386
          %v391 = vrsqrt.pop %v347
          %v392 = vmul.f32 %v391, %v347
          %v393 = vmul.f32 %v392, %v391
          %v394 = vmul.f32 0.5, %v393
          %v395 = vsub.f32 1.5, %v394
          %v396 = vmul.f32 %v391, %v395
          %vm397 = vweird.f32 %v347
          %vm398 = vweird.f32 %v391
          %vm399 = vmor %vm397, %vm398
          %v400 = vsel %vm399, %v391, %v396
          %v401 = vrsqrt.pop %v348
          %v402 = vmul.f32 %v401, %v348
          %v403 = vmul.f32 %v402, %v401
          %v404 = vmul.f32 0.5, %v403
          %v405 = vsub.f32 1.5, %v404
          %v406 = vmul.f32 %v401, %v405
          %vm407 = vweird.f32 %v348
          %vm408 = vweird.f32 %v401
          %vm409 = vmor %vm407, %vm408
          %v410 = vsel %vm409, %v401, %v406
          %v411 = vrsqrt.pop %v349
          %v412 = vmul.f32 %v411, %v349
          %v413 = vmul.f32 %v412, %v411
          %v414 = vmul.f32 0.5, %v413
          %v415 = vsub.f32 1.5, %v414
          %v416 = vmul.f32 %v411, %v415
          %vm417 = vweird.f32 %v349
          %vm418 = vweird.f32 %v411
          %vm419 = vmor %vm417, %vm418
          %v420 = vsel %vm419, %v411, %v416
          %v421 = vrsqrt.pop %v350
          %v422 = vmul.f32 %v421, %v350
          %v423 = vmul.f32 %v422, %v421
          %v424 = vmul.f32 0.5, %v423
          %v425 = vsub.f32 1.5, %v424
          %v426 = vmul.f32 %v421, %v425
          %vm427 = vweird.f32 %v350
          %vm428 = vweird.f32 %v421
          %vm429 = vmor %vm427, %vm428
          %v430 = vsel %vm429, %v421, %v426
          %v431 = vmul.f32 %v303, %v360
          %v432 = vmul.f32 %v304, %v370
          %v433 = vmul.f32 %v305, %v380
          %v434 = vmul.f32 %v306, %v390
          %v435 = vmul.f32 %v307, %v400
          %v436 = vmul.f32 %v308, %v410
          %v437 = vmul.f32 %v309, %v420
          %v438 = vmul.f32 %v310, %v430
          %v439 = vld [vmem:[%s2] sm:$0x1]
          %v441 = vperm.slane %v439, 0
          %v443 = vmul.f32 %v431, %v441
          %v444 = vmul.f32 %v432, %v441
          %v445 = vmul.f32 %v433, %v441
          %v446 = vmul.f32 %v434, %v441
          %v447 = vmul.f32 %v435, %v441
          %v448 = vmul.f32 %v436, %v441
          %v449 = vmul.f32 %v437, %v441
          %v450 = vmul.f32 %v438, %v441
          %v451 = vld [vmem:[%s3] sm:$0x1]
          %v453 = vperm.slane %v451, 0
          %v455 = vadd.f32 %v443, %v453
          %v456 = vadd.f32 %v444, %v453
          %v457 = vadd.f32 %v445, %v453
          %v458 = vadd.f32 %v446, %v453
          %v459 = vadd.f32 %v447, %v453
          %v460 = vadd.f32 %v448, %v453
          %v461 = vadd.f32 %v449, %v453
          %v462 = vadd.f32 %v450, %v453
          %v463 = vpack.c.bf16 %v455, %v455
          %v464 = vpack.c.bf16 %v456, %v456
          %v465 = vpack.c.bf16 %v457, %v457
          %v466 = vpack.c.bf16 %v458, %v458
          %v467 = vpack.c.bf16 %v459, %v459
          %v468 = vpack.c.bf16 %v460, %v460
          %v469 = vpack.c.bf16 %v461, %v461
          %v470 = vpack.c.bf16 %v462, %v462
          %471 = vst [vmem:[#allocation2] sm:$0xf] %v463
          %472 = vst [vmem:[#allocation2 + $0x4] sm:$0xf] %v464
          %473 = vst [vmem:[#allocation2 + $0x8] sm:$0xf] %v465
          %474 = vst [vmem:[#allocation2 + $0xc] sm:$0xf] %v466
          %475 = vst [vmem:[#allocation2 + $0x10] sm:$0xf] %v467
          %476 = vst [vmem:[#allocation2 + $0x14] sm:$0xf] %v468
          %477 = vst [vmem:[#allocation2 + $0x18] sm:$0xf] %v469
          %478 = vst [vmem:[#allocation2 + $0x1c] sm:$0xf] %v470
        $region48: #{tpu_custom_call.1} parent=35 // pred_fallthru
          _
        %v479 = vld [vmem:[#allocation2] sm:$0xf]
        %v480 = vld [vmem:[#allocation2 + $0x4] sm:$0xf]
        %v481 = vld [vmem:[#allocation2 + $0x8] sm:$0xf]
        %v482 = vld [vmem:[#allocation2 + $0xc] sm:$0xf]
        %v483 = vld [vmem:[#allocation2 + $0x10] sm:$0xf]
        %v484 = vld [vmem:[#allocation2 + $0x14] sm:$0xf]
        %v485 = vld [vmem:[#allocation2 + $0x18] sm:$0xf]
        %v486 = vld [vmem:[#allocation2 + $0x1c] sm:$0xf]
        %v487 = vld [vmem:[#allocation8] sm:$0xf]
        %v488 = vld [vmem:[#allocation8 + $0x4] sm:$0xf]
        %v489 = vld [vmem:[#allocation8 + $0x8] sm:$0xf]
        %v490 = vld [vmem:[#allocation8 + $0xc] sm:$0xf]
        %v491 = vld [vmem:[#allocation8 + $0x10] sm:$0xf]
        %v492 = vld [vmem:[#allocation8 + $0x14] sm:$0xf]
        %v493 = vld [vmem:[#allocation8 + $0x18] sm:$0xf]
        %v494 = vld [vmem:[#allocation8 + $0x1c] sm:$0xf]
        %v495 = vld [vmem:[#allocation8 + $0x20] sm:$0xf]
        %v496 = vld [vmem:[#allocation8 + $0x24] sm:$0xf]
        %v497 = vld [vmem:[#allocation8 + $0x28] sm:$0xf]
        %v498 = vld [vmem:[#allocation8 + $0x2c] sm:$0xf]
        %v499 = vld [vmem:[#allocation8 + $0x30] sm:$0xf]
        %v500 = vld [vmem:[#allocation8 + $0x34] sm:$0xf]
        %v501 = vld [vmem:[#allocation8 + $0x38] sm:$0xf]
        %v502 = vld [vmem:[#allocation8 + $0x3c] sm:$0xf]
        %v511 = vunpack.c.l.b16 %v479
        %v512 = vunpack.c.l.b16 %v480
        %v513 = vunpack.c.l.b16 %v481
        %v514 = vunpack.c.l.b16 %v482
        %v515 = vunpack.c.l.b16 %v483
        %v516 = vunpack.c.l.b16 %v484
        %v517 = vunpack.c.l.b16 %v485
        %v518 = vunpack.c.l.b16 %v486
        %v519 = vpack.c.b16 %v512, %v511
        %v520 = vpack.c.b16 %v514, %v513
        %v521 = vpack.c.b16 %v516, %v515
        %v522 = vpack.c.b16 %v518, %v517
        %v543 = vunpack.c.l.b16 %v487
        %v544 = vunpack.c.l.b16 %v488
        %v545 = vunpack.c.l.b16 %v489
        %v546 = vunpack.c.l.b16 %v490
        %v547 = vunpack.c.l.b16 %v491
        %v548 = vunpack.c.l.b16 %v492
        %v549 = vunpack.c.l.b16 %v493
        %v550 = vunpack.c.l.b16 %v494
        %v551 = vunpack.c.l.b16 %v495
        %v552 = vunpack.c.l.b16 %v496
        %v553 = vunpack.c.l.b16 %v497
        %v554 = vunpack.c.l.b16 %v498
        %v555 = vunpack.c.l.b16 %v499
        %v556 = vunpack.c.l.b16 %v500
        %v557 = vunpack.c.l.b16 %v501
        %v558 = vunpack.c.l.b16 %v502
        %v559 = vpack.c.b16 %v544, %v543
        %v560 = vpack.c.b16 %v546, %v545
        %v561 = vpack.c.b16 %v548, %v547
        %v562 = vpack.c.b16 %v550, %v549
        %v563 = vpack.c.b16 %v552, %v551
        %v564 = vpack.c.b16 %v554, %v553
        %v565 = vpack.c.b16 %v556, %v555
        %v566 = vpack.c.b16 %v558, %v557
        %575 = vmatpush.bf16.msra.mxu0 %v566
        %576 = vmatpush.bf16.msra.mxu0 %v565
        %577 = vmatpush.bf16.msra.mxu0 %v564
        %578 = vmatpush.bf16.msra.mxu0 %v563
        %579 = vmatpush.bf16.msra.mxu0 %v562
        %580 = vmatpush.bf16.msra.mxu0 %v561
        %581 = vmatpush.bf16.msra.mxu0 %v560
        %582 = vmatpush.bf16.msra.mxu0 %v559
        %583 = vmatmul.bf16.gmra.mxu0 %v519
        %v584 = vpop.f32.mrf.mxu0
        %v585 = vadd.f32 0.0, %v584
        %v586 = vpop.f32.mrf.mxu0
        %v587 = vadd.f32 0.0, %v586
        %588 = vmatmul.bf16.gmra.mxu0 %v520
        %v589 = vpop.f32.mrf.mxu0
        %v590 = vadd.f32 0.0, %v589
        %v591 = vpop.f32.mrf.mxu0
        %v592 = vadd.f32 0.0, %v591
        %593 = vmatmul.bf16.gmra.mxu0 %v521
        %v594 = vpop.f32.mrf.mxu0
        %v595 = vadd.f32 0.0, %v594
        %v596 = vpop.f32.mrf.mxu0
        %v597 = vadd.f32 0.0, %v596
        %598 = vmatmul.bf16.gmra.mxu0 %v522
        %v599 = vpop.f32.mrf.mxu0
        %v600 = vadd.f32 0.0, %v599
        %v601 = vpop.f32.mrf.mxu0
        %v602 = vadd.f32 0.0, %v601
        %603 = vdwg.mxu0
        %s604 = sld [smem:[#allocation4]]
        %v605 = vlaneseq
        %v606 = vshrl.u32 %v605, 7
        %v607 = vadd.s32 %v606, 8
        %v608 = vadd.s32 %v606, 16
        %v609 = vadd.s32 %v606, 24
        %v610 = vadd.s32 %v606, 32
        %v611 = vadd.s32 %v606, 40
        %v612 = vadd.s32 %v606, 48
        %v613 = vadd.s32 %v606, 56
        %s614 = smul.u32 %s28, 64
        %v615 = vstv %s614
        %v616 = vadd.s32 %v606, %v615
        %v617 = vadd.s32 %v607, %v615
        %v618 = vadd.s32 %v608, %v615
        %v619 = vadd.s32 %v609, %v615
        %v620 = vadd.s32 %v610, %v615
        %v621 = vadd.s32 %v611, %v615
        %v622 = vadd.s32 %v612, %v615
        %v623 = vadd.s32 %v613, %v615
        %v624 = vlaneseq
        %v625 = vand.u32 %v624, 127
        %s626 = smul.u32 %s29, 128
        %v627 = vstv %s626
        %v628 = vadd.s32 %v625, %v627
        %v629 = vmul.u32 %v616, 214013
        %v630 = vmul.u32 %v617, 214013
        %v631 = vmul.u32 %v618, 214013
        %v632 = vmul.u32 %v619, 214013
        %v633 = vmul.u32 %v620, 214013
        %v634 = vmul.u32 %v621, 214013
        %v635 = vmul.u32 %v622, 214013
        %v636 = vmul.u32 %v623, 214013
        %v637 = vstv %s604
        %v638 = vadd.s32 %v629, %v637
        %v639 = vadd.s32 %v630, %v637
        %v640 = vadd.s32 %v631, %v637
        %v641 = vadd.s32 %v632, %v637
        %v642 = vadd.s32 %v633, %v637
        %v643 = vadd.s32 %v634, %v637
        %v644 = vadd.s32 %v635, %v637
        %v645 = vadd.s32 %v636, %v637
        %v646 = vshra.s32 %v638, 15
        %v647 = vshra.s32 %v639, 15
        %v648 = vshra.s32 %v640, 15
        %v649 = vshra.s32 %v641, 15
        %v650 = vshra.s32 %v642, 15
        %v651 = vshra.s32 %v643, 15
        %v652 = vshra.s32 %v644, 15
        %v653 = vshra.s32 %v645, 15
        %v654 = vand.u32 %v646, 131071
        %v655 = vand.u32 %v647, 131071
        %v656 = vand.u32 %v648, 131071
        %v657 = vand.u32 %v649, 131071
        %v658 = vand.u32 %v650, 131071
        %v659 = vand.u32 %v651, 131071
        %v660 = vand.u32 %v652, 131071
        %v661 = vand.u32 %v653, 131071
        %v662 = vxor.u32 %v638, %v654
        %v663 = vxor.u32 %v639, %v655
        %v664 = vxor.u32 %v640, %v656
        %v665 = vxor.u32 %v641, %v657
        %v666 = vxor.u32 %v642, %v658
        %v667 = vxor.u32 %v643, %v659
        %v668 = vxor.u32 %v644, %v660
        %v669 = vxor.u32 %v645, %v661
        %v670 = vmul.u32 %v662, 1103515245
        %v671 = vmul.u32 %v663, 1103515245
        %v672 = vmul.u32 %v664, 1103515245
        %v673 = vmul.u32 %v665, 1103515245
        %v674 = vmul.u32 %v666, 1103515245
        %v675 = vmul.u32 %v667, 1103515245
        %v676 = vmul.u32 %v668, 1103515245
        %v677 = vmul.u32 %v669, 1103515245
        %v678 = vadd.s32 %v670, 12345
        %v679 = vadd.s32 %v671, 12345
        %v680 = vadd.s32 %v672, 12345
        %v681 = vadd.s32 %v673, 12345
        %v682 = vadd.s32 %v674, 12345
        %v683 = vadd.s32 %v675, 12345
        %v684 = vadd.s32 %v676, 12345
        %v685 = vadd.s32 %v677, 12345
        %v686 = vshra.s32 %v678, 12
        %v687 = vshra.s32 %v679, 12
        %v688 = vshra.s32 %v680, 12
        %v689 = vshra.s32 %v681, 12
        %v690 = vshra.s32 %v682, 12
        %v691 = vshra.s32 %v683, 12
        %v692 = vshra.s32 %v684, 12
        %v693 = vshra.s32 %v685, 12
        %v694 = vand.u32 %v686, 1048575
        %v695 = vand.u32 %v687, 1048575
        %v696 = vand.u32 %v688, 1048575
        %v697 = vand.u32 %v689, 1048575
        %v698 = vand.u32 %v690, 1048575
        %v699 = vand.u32 %v691, 1048575
        %v700 = vand.u32 %v692, 1048575
        %v701 = vand.u32 %v693, 1048575
        %v702 = vxor.u32 %v678, %v694
        %v703 = vxor.u32 %v679, %v695
        %v704 = vxor.u32 %v680, %v696
        %v705 = vxor.u32 %v681, %v697
        %v706 = vxor.u32 %v682, %v698
        %v707 = vxor.u32 %v683, %v699
        %v708 = vxor.u32 %v684, %v700
        %v709 = vxor.u32 %v685, %v701
        %v710 = vmul.u32 %v702, 214013
        %v711 = vmul.u32 %v703, 214013
        %v712 = vmul.u32 %v704, 214013
        %v713 = vmul.u32 %v705, 214013
        %v714 = vmul.u32 %v706, 214013
        %v715 = vmul.u32 %v707, 214013
        %v716 = vmul.u32 %v708, 214013
        %v717 = vmul.u32 %v709, 214013
        %v718 = vadd.s32 %v710, 2531011
        %v719 = vadd.s32 %v711, 2531011
        %v720 = vadd.s32 %v712, 2531011
        %v721 = vadd.s32 %v713, 2531011
        %v722 = vadd.s32 %v714, 2531011
        %v723 = vadd.s32 %v715, 2531011
        %v724 = vadd.s32 %v716, 2531011
        %v725 = vadd.s32 %v717, 2531011
        %v726 = vshra.s32 %v718, 8
        %v727 = vshra.s32 %v719, 8
        %v728 = vshra.s32 %v720, 8
        %v729 = vshra.s32 %v721, 8
        %v730 = vshra.s32 %v722, 8
        %v731 = vshra.s32 %v723, 8
        %v732 = vshra.s32 %v724, 8
        %v733 = vshra.s32 %v725, 8
        %v734 = vand.u32 %v726, 16777215
        %v735 = vand.u32 %v727, 16777215
        %v736 = vand.u32 %v728, 16777215
        %v737 = vand.u32 %v729, 16777215
        %v738 = vand.u32 %v730, 16777215
        %v739 = vand.u32 %v731, 16777215
        %v740 = vand.u32 %v732, 16777215
        %v741 = vand.u32 %v733, 16777215
        %s742 = sxor.u32 %s604, 668265263
        %v743 = vmul.u32 %v628, 214013
        %v744 = vstv %s742
        %v745 = vadd.s32 %v743, %v744
        %v746 = vshra.s32 %v745, 15
        %v747 = vand.u32 %v746, 131071
        %v748 = vxor.u32 %v745, %v747
        %v749 = vmul.u32 %v748, 1103515245
        %v750 = vadd.s32 %v749, 12345
        %v751 = vshra.s32 %v750, 12
        %v752 = vand.u32 %v751, 1048575
        %v753 = vxor.u32 %v750, %v752
        %v754 = vmul.u32 %v753, 214013
        %v755 = vadd.s32 %v754, 2531011
        %v756 = vshra.s32 %v755, 8
        %v757 = vand.u32 %v756, 16777215
        %v758 = vxor.u32 %v734, %v757
        %v759 = vxor.u32 %v735, %v757
        %v760 = vxor.u32 %v736, %v757
        %v761 = vxor.u32 %v737, %v757
        %v762 = vxor.u32 %v738, %v757
        %v763 = vxor.u32 %v739, %v757
        %v764 = vxor.u32 %v740, %v757
        %v765 = vxor.u32 %v741, %v757
        %vm766 = vcmp.ge.s32.totalorder %v758, 1677722
        %vm767 = vcmp.ge.s32.totalorder %v759, 1677722
        %vm768 = vcmp.ge.s32.totalorder %v760, 1677722
        %vm769 = vcmp.ge.s32.totalorder %v761, 1677722
        %vm770 = vcmp.ge.s32.totalorder %v762, 1677722
        %vm771 = vcmp.ge.s32.totalorder %v763, 1677722
        %vm772 = vcmp.ge.s32.totalorder %v764, 1677722
        %vm773 = vcmp.ge.s32.totalorder %v765, 1677722
        %v774 = vsel %vm766, %v585, 0.0
        %v775 = vsel %vm767, %v587, 0.0
        %v776 = vsel %vm768, %v590, 0.0
        %v777 = vsel %vm769, %v592, 0.0
        %v778 = vsel %vm770, %v595, 0.0
        %v779 = vsel %vm771, %v597, 0.0
        %v780 = vsel %vm772, %v600, 0.0
        %v781 = vsel %vm773, %v602, 0.0
        %v782 = vld [vmem:[%s227] sm:$0xff]
        %v783 = vld [vmem:[%s227 + $0x8] sm:$0xff]
        %v784 = vld [vmem:[%s227 + $0x10] sm:$0xff]
        %v785 = vld [vmem:[%s227 + $0x18] sm:$0xff]
        %v786 = vld [vmem:[%s227 + $0x20] sm:$0xff]
        %v787 = vld [vmem:[%s227 + $0x28] sm:$0xff]
        %v788 = vld [vmem:[%s227 + $0x30] sm:$0xff]
        %v789 = vld [vmem:[%s227 + $0x38] sm:$0xff]
        %v790 = vadd.f32 %v782, %v774
        %v791 = vadd.f32 %v783, %v775
        %v792 = vadd.f32 %v784, %v776
        %v793 = vadd.f32 %v785, %v777
        %v794 = vadd.f32 %v786, %v778
        %v795 = vadd.f32 %v787, %v779
        %v796 = vadd.f32 %v788, %v780
        %v797 = vadd.f32 %v789, %v781
        %798 = vst [vmem:[%s257] sm:$0xff] %v790
        %799 = vst [vmem:[%s257 + $0x8] sm:$0xff] %v791
        %800 = vst [vmem:[%s257 + $0x10] sm:$0xff] %v792
        %801 = vst [vmem:[%s257 + $0x18] sm:$0xff] %v793
        %802 = vst [vmem:[%s257 + $0x20] sm:$0xff] %v794
        %803 = vst [vmem:[%s257 + $0x28] sm:$0xff] %v795
        %804 = vst [vmem:[%s257 + $0x30] sm:$0xff] %v796
        %805 = vst [vmem:[%s257 + $0x38] sm:$0xff] %v797
        %s806 = sand.u32 %s140, 1
        %s807 = scalar_lea.sflag [#allocation7], %s806
        %s808 = sand.u32 %s140, 1
        %s809 = smul.addr %s808, 64
        %s810 = scalar_lea.vmem [#allocation10], %s809
        // Predicated region
        $region49: #{tpu_custom_call.1} parent=35 // pred_check
          %p811 = pneg %p150
        $region50: #{tpu_custom_call.1} parent=35 // pred_check_branch
          %813 = sbr.rel (%p811) target = $region52
        $region51: #{tpu_custom_call.1} parent=35 // pred_region
          %s814 = smul.u32 8, %s28
          %816 = vsyncadd %s807, 0
          %s817 = sadd.s32 %s29, %s814
          %s818 = smul.addr %s817, 8
          %s819 = scalar_lea.hbm %s5, %s818
          %s820 = sshll.u32 %s810, 4
          %s821 = int_to_ptr.vmem [resolvable:$true] %s820
          %s822 = sshll.u32 %s819, 4
          %s823 = int_to_ptr.hbm [resolvable:$true] %s822
          %828 = dma.vmem_to_hbm [thread:$0]  %s821, 1024, %s823, %s807, 128, 128, 8
        $region52: #{tpu_custom_call.1} parent=35 // pred_fallthru
          _
      $region36: #{tpu_custom_call.1} parent=5 // pred_fallthru
        _
      %p829 = scmp.le.s32.totalorder 2, %s19
      // Predicated region
      $region53: #{tpu_custom_call.1} parent=5 // pred_check
        %p830 = pneg %p829
      $region54: #{tpu_custom_call.1} parent=5 // pred_check_branch
        %832 = sbr.rel (%p830) target = $region56
      $region55: #{tpu_custom_call.1} parent=5 // pred_region
        %s833 = ssub.s32 %s19, 2
        // Predicated region
        $region57: #{tpu_custom_call.1} parent=55 // pred_check
          %p834 = pneg %p156
        $region58: #{tpu_custom_call.1} parent=55 // pred_check_branch
          %836 = sbr.rel (%p834) target = $region60
        $region59: #{tpu_custom_call.1} parent=55 // pred_region
          %s837 = sand.u32 %s141, 1
          %s838 = scalar_lea.sflag [#allocation7], %s837
          %s839 = sand.u32 %s141, 1
          %s840 = smul.addr %s839, 64
          %s841 = scalar_lea.vmem [#allocation10], %s840
          %843 = dma.done %s838, 1024
        $region60: #{tpu_custom_call.1} parent=55 // pred_fallthru
          _
      $region56: #{tpu_custom_call.1} parent=5 // pred_fallthru
        _
    $region6: #{tpu_custom_call.1} parent=1 // loop_footer
      %s23 = sadd.s32 1, %s19
    $region7: #{tpu_custom_call.1} parent=1 // loop_footer_branch
      %18 = sbr.rel target = $region3
    $region8: #{tpu_custom_call.1} parent=1 // loop_exit
      _
    %844 = vsyncpa [#allocation6], 1
    %s845 = scalar_lea.sflag [#allocation6], 1
    %846 = vsyncpa %s845, 1
    %847 = vsyncpa [#allocation9], 1
    %848 = vsyncpa [#allocation7], 1
    %s849 = scalar_lea.sflag [#allocation7], 1
    %850 = vsyncpa %s849, 1

</llo_original>
